<compile_context>
chip_gen: v7x
topology: tpu7x:2x2x1
jax: 0.10.0
libtpu: 0.0.40
codegen_flags: <defaults>
</compile_context>

<pallas_src>
import math

import jax
import jax.numpy as jnp
from jax.experimental import pallas as pl
from jax.experimental.pallas import tpu as pltpu


# -----------------------------------------------------------------------------
# Kernel body
# -----------------------------------------------------------------------------
def _make_kernel(has_mask, mode, inv_sqrt_dk, mxu_dtype, exp_dtype):
    """Build the kernel body.

    mode:
      'single'      -- one Sk step: compute and write o_ref directly.
      'acc_out'     -- f32 output: accumulate into the VMEM-resident output
                       block across the 'arbitrary' Sk grid axis.
      'acc_scratch' -- non-f32 output: accumulate in an f32 VMEM scratch and
                       cast once at the last Sk step.
    """

    def kernel(*refs):
        if has_mask:
            q_ref, k_ref, v_ref, m_ref, o_ref = refs[:5]
            scratch = refs[5:]
            m = m_ref[0]
        else:
            q_ref, k_ref, v_ref, o_ref = refs[:4]
            scratch = refs[4:]
            m = None

        # Scale Q (H*TQ*Dk elements) rather than the scores (H*TQ*TK): the
        # positive scale commutes with max/exp, saving TK/Dk VPU multiplies.
        q = q_ref[0]
        q = (q * jnp.asarray(inv_sqrt_dk, dtype=q.dtype)).astype(mxu_dtype)
        k = k_ref[0].astype(mxu_dtype)

        # bf16 MXU feed, f32 accumulation.
        scores = jnp.einsum("hqd,hkd->hqk", q, k,
                            preferred_element_type=jnp.float32)

        if m is not None:
            # masked_fill(mask == 0, -1e20); int8 mask broadcasts over size-1 dims.
            scores = jnp.where(m == 0, jnp.float32(-1e20), scores)

        # F.softmax(scores): PyTorch's implicit dim for a 4-D tensor is dim=1,
        # i.e. the HEAD axis (leading axis of this (H, TQ, TK) tile).
        smax = jnp.max(scores, axis=0, keepdims=True)
        # exp on the EUP (bf16 path on v6e/v7x, f32 on v5e); the cheap reduce
        # over H and the approximate reciprocal stay in f32.
        e = jnp.exp((scores - smax).astype(exp_dtype)).astype(jnp.float32)
        denom = jnp.sum(e, axis=0, keepdims=True)
        w = (e * pl.reciprocal(denom, approx=True)).astype(mxu_dtype)

        pv = jnp.einsum("hqk,hkd->hqd", w, v_ref[0].astype(mxu_dtype),
                        preferred_element_type=jnp.float32)

        if mode == "single":
            o_ref[0] = pv.astype(o_ref.dtype)
        elif mode == "acc_out":
            # f32 output block stays resident in VMEM across the 'arbitrary'
            # ki axis -> accumulate in place (no scratch, no finalize pass).
            @pl.when(pl.program_id(2) == 0)
            def _():
                o_ref[0] = pv

            @pl.when(pl.program_id(2) > 0)
            def _():
                o_ref[0] = o_ref[0] + pv
        else:  # 'acc_scratch'
            acc_ref = scratch[0]

            @pl.when(pl.program_id(2) == 0)
            def _():
                acc_ref[...] = pv

            @pl.when(pl.program_id(2) > 0)
            def _():
                acc_ref[...] += pv

            @pl.when(pl.program_id(2) == pl.num_programs(2) - 1)
            def _():
                o_ref[0] = acc_ref[...].astype(o_ref.dtype)

    return kernel


# -----------------------------------------------------------------------------
# Per-chip sizing helpers
# -----------------------------------------------------------------------------
def _vmem_budget_bytes():
    """~75% of per-TensorCore VMEM: ~96 MiB on v5e/v6e (128 MiB physical),
    ~48 MiB on v7x (64 MiB physical) -- headroom for compiler scratch."""
    cap = None
    try:
        cap = int(pltpu.get_tpu_info().vmem_capacity_bytes)
    except Exception:
        cap = None
    if cap is None or cap <= 0:
        kind = ""
        try:
            kind = jax.devices()[0].device_kind.lower()
        except Exception:
            pass
        cap = (64 if ("v7" in kind or "7x" in kind) else 128) * 1024 * 1024
    return (cap * 3) // 4


def _default_exp_dtype():
    """bf16 exp on chips with a bf16 EUP path (v6e/v7x); f32 on v5e and older."""
    try:
        kind = jax.devices()[0].device_kind.lower()
    except Exception:
        return jnp.float32
    if "v6" in kind or "v7" in kind or "7x" in kind:
        return jnp.bfloat16
    return jnp.float32


def _tile_candidates(dim, align, cap):
    """Divisors of `dim` that are multiples of `align`, descending, capped at
    `cap`.  The full axis (always a legal block) leads when dim <= cap and is
    the last resort otherwise."""
    cands = []
    if dim <= cap:
        cands.append(dim)
    t = (min(dim, cap) // align) * align
    while t >= align:
        if dim % t == 0 and t not in cands:
            cands.append(t)
        t -= align
    if dim not in cands:
        # TODO(synk): pad badly-aligned long sequences in the wrapper instead of
        # falling back to a whole-axis block.
        cands.append(dim)
    return cands


# -----------------------------------------------------------------------------
# Wrapper
# -----------------------------------------------------------------------------
def dot_product_attention(queries, keys, values, d_k, mask=None, *,
                          tile_q=None, tile_k=None, exp_dtype=None):
    """Pallas TPU implementation of DotProductAttention.forward."""
    B, H, Sq, Dk = queries.shape
    Sk = keys.shape[2]
    Dv = values.shape[-1]
    out_dtype = queries.dtype
    in_isz = jnp.dtype(queries.dtype).itemsize
    out_isz = jnp.dtype(out_dtype).itemsize

    # MXU is bf16-native on every generation: feed it bf16 even for f32 callers
    # (accumulation stays f32 via preferred_element_type).
    mxu_dtype = (jnp.bfloat16 if jnp.dtype(queries.dtype) == jnp.float32
                 else queries.dtype)
    if exp_dtype is None:
        exp_dtype = _default_exp_dtype()

    # --- mask preprocessing: keep it un-broadcast (size-1 dims) in HBM as int8.
    mask_info = None
    if mask is not None:
        m = jnp.asarray(mask)
        if m.ndim > 4:
            raise ValueError("mask must be broadcastable to [B, H, Sq, Sk]")
        m4 = m.reshape((1,) * (4 - m.ndim) + m.shape)
        mb, mh, mq, mk = m4.shape
        if (mb not in (1, B) or mh not in (1, H)
                or mq not in (1, Sq) or mk not in (1, Sk)):
            raise ValueError("mask must be broadcastable to [B, H, Sq, Sk]")
        mask_info = ((m4 != 0).astype(jnp.int8), mb, mh, mq, mk)

    # --- per-chip VMEM budget & tile selection --------------------------------
    budget = _vmem_budget_bytes()
    # TK lands on the lane (last) axis of the mask block -> 128-aligned when the
    # mask is tiled along Sk; plain 8-sublane alignment otherwise.
    align_k = 128 if (mask_info is not None and mask_info[4] == Sk) else 8
    tq_cands = _tile_candidates(Sq, 8, tile_q if tile_q is not None else 512)
    tk_cands = _tile_candidates(Sk, align_k, tile_k if tile_k is not None else Sk)

    def footprint(TQ, TK):
        nk = Sk // TK
        b = 2 * H * TQ * Dk * in_isz           # Q block (double-buffered)
        b += 2 * H * TK * Dk * in_isz          # K block
        b += 2 * H * TK * Dv * in_isz          # V block
        b += 2 * H * TQ * Dv * out_isz         # output block
        if mask_info is not None:
            _, _, mh, mq, mk = mask_info
            b += 2 * mh * (TQ if mq == Sq else 1) * (TK if mk == Sk else 1)
        if nk > 1 and jnp.dtype(out_dtype) != jnp.float32:
            b += H * TQ * Dv * 4               # f32 accumulator scratch
        b += 3 * H * TQ * TK * 4               # scores/exp/weights temporaries
        return b

    chosen = None
    # Regime 1: K/V resident (TK == Sk).  K/V are DMA'd from HBM exactly once
    # per batch element and never re-streamed across the Sq tiles; the Sk grid
    # axis collapses to one step so no accumulator is needed either.
    if tile_k is None or tile_k >= Sk:
        min_tq = min(Sq, 128)
        for TQ in tq_cands:
            if TQ >= min_tq and footprint(TQ, Sk) <= budget:
                chosen = (TQ, Sk)
                break
    # Regime 2: K/V streamed.  TQ is the HBM-traffic lever (K/V are re-read
    # Sq/TQ times), so maximize TQ first, then TK.
    if chosen is None:
        for TQ in tq_cands:
            for TK in tk_cands:
                if footprint(TQ, TK) <= budget:
                    chosen = (TQ, TK)
                    break
            if chosen is not None:
                break
    if chosen is None:
        chosen = (min(tq_cands), min(tk_cands))
    TQ, TK = chosen

    # Megacore / multi-TC occupancy: make sure the 'parallel' grid extent is at
    # least 2 (v7x has 2 TCs; the cost on single-TC chips is one extra step).
    if B * (Sq // TQ) < 2 and Sq >= 16:
        t = (TQ // 2) // 8 * 8
        while t >= 8:
            if Sq % t == 0:
                TQ = t
                break
            t -= 8

    nq, nk = Sq // TQ, Sk // TK
    grid = (B, nq, nk)

    if nk == 1:
        mode = "single"
    elif jnp.dtype(out_dtype) == jnp.float32:
        mode = "acc_out"
    else:
        mode = "acc_scratch"

    # --- specs -----------------------------------------------------------------
    in_specs = [
        pl.BlockSpec((1, H, TQ, Dk), lambda b, qi, ki: (b, 0, qi, 0)),   # Q
        pl.BlockSpec((1, H, TK, Dk), lambda b, qi, ki: (b, 0, ki, 0)),   # K
        pl.BlockSpec((1, H, TK, Dv), lambda b, qi, ki: (b, 0, ki, 0)),   # V
    ]
    args = [queries, keys, values]

    if mask_info is not None:
        m_i8, mb, mh, mq, mk = mask_info
        mask_block = (1, mh, TQ if mq == Sq else 1, TK if mk == Sk else 1)

        def mask_map(b, qi, ki, _mb=mb, _mq=mq, _mk=mk):
            return (b if _mb != 1 else 0, 0,
                    qi if _mq != 1 else 0,
                    ki if _mk != 1 else 0)

        in_specs.append(pl.BlockSpec(mask_block, mask_map))
        args.append(m_i8)

    scratch_shapes = []
    if mode == "acc_scratch":
        scratch_shapes = [pltpu.VMEM((H, TQ, Dv), jnp.float32)]

    kernel = _make_kernel(mask_info is not None, mode, 1.0 / math.sqrt(d_k),
                          mxu_dtype, exp_dtype)

    # --- advisory cost estimate (accounts for K/V/mask re-streaming) ------------
    kv_refetch = nq if nk > 1 else 1
    bytes_accessed = (B * H * Sq * Dk * in_isz
                      + B * kv_refetch * H * Sk * (Dk + Dv) * in_isz
                      + B * H * Sq * Dv * out_isz)
    if mask_info is not None:
        m_i8, mb, mh, mq, mk = mask_info
        blk = mh * (TQ if mq == Sq else 1) * (TK if mk == Sk else 1)
        bytes_accessed += B * (nq if mq == Sq else 1) * (nk if mk == Sk else 1) * blk

    # TODO(synk): with Dv < 128 the output store lowers to masked vst.msk; a
    # lane-dense [B, Sq, H*Dv] internal layout (transposed back in the wrapper)
    # would avoid that at the cost of an extra XLA transpose of the result.
    return pl.pallas_call(
        kernel,
        out_shape=jax.ShapeDtypeStruct((B, H, Sq, Dv), out_dtype),
        grid_spec=pltpu.PrefetchScalarGridSpec(
            num_scalar_prefetch=0,
            grid=grid,
            in_specs=in_specs,
            out_specs=pl.BlockSpec((1, H, TQ, Dv),
                                   lambda b, qi, ki: (b, 0, qi, 0)),
            scratch_shapes=scratch_shapes,
        ),
        compiler_params=pltpu.CompilerParams(
            dimension_semantics=("parallel", "parallel", "arbitrary"),
            vmem_limit_bytes=int(budget),
        ),
        cost_estimate=pl.CostEstimate(
            flops=2 * B * H * Sq * Sk * (Dk + Dv),
            transcendentals=B * H * Sq * Sk,
            bytes_accessed=int(bytes_accessed),
        ),
    )(*args)


# -----------------------------------------------------------------------------
# Reference & checks
# -----------------------------------------------------------------------------
def _reference(queries, keys, values, d_k, mask=None):
    scores = jnp.einsum("bhqd,bhkd->bhqk", queries, keys,
                        precision=jax.lax.Precision.HIGHEST) / math.sqrt(d_k)
    if mask is not None:
        scores = jnp.where(mask == 0, -1e20, scores)
    # PyTorch's F.softmax(scores) without dim= -> dim=1 for a 4-D tensor (heads).
    weights = jax.nn.softmax(scores, axis=1)
    return jnp.einsum("bhqk,bhkd->bhqd", weights, values,
                      precision=jax.lax.Precision.HIGHEST)


def _check(queries, keys, values, d_k, mask=None, **kw):
    out = jax.block_until_ready(
        dot_product_attention(queries, keys, values, d_k, mask, **kw))
    ref = _reference(queries, keys, values, d_k, mask)
    assert out.shape == ref.shape and out.dtype == ref.dtype
    # bf16 MXU feed + approximate reciprocal: because the softmax normalizes
    # over H (PyTorch's implicit dim=1), each output element is a sum of
    # ~Sk/H-weighted values, so the absolute error grows with the output's
    # dynamic range -- compare against that scale rather than a per-element rtol.
    err = float(jnp.max(jnp.abs(out.astype(jnp.float32) - ref.astype(jnp.float32))))
    scale = float(jnp.max(jnp.abs(ref.astype(jnp.float32))))
    assert err <= 2e-2 * scale + 2e-2, (err, scale)
    return out


if __name__ == "__main__":
    key = jax.random.PRNGKey(0)

    # ---- small shapes (one tile per batch element), with & without mask ------
    B, H, Sq, Sk, Dk, Dv = 2, 4, 8, 8, 32, 32
    kq, kk, kv, km = jax.random.split(key, 4)
    queries = jax.random.normal(kq, (B, H, Sq, Dk), dtype=jnp.float32)
    keys = jax.random.normal(kk, (B, H, Sk, Dk), dtype=jnp.float32)
    values = jax.random.normal(kv, (B, H, Sk, Dv), dtype=jnp.float32)
    mask = (jax.random.uniform(km, (B, 1, Sq, Sk)) > 0.3).astype(jnp.float32)

    _check(queries, keys, values, Dk, mask=None)
    _check(queries, keys, values, Dk, mask=mask)

    # ---- moderate shapes: auto-tiling keeps K/V resident (TK == Sk) ----------
    B2, H2, Sq2, Sk2, Dk2, Dv2 = 2, 4, 256, 256, 64, 64
    kq2, kk2, kv2, km2 = jax.random.split(jax.random.PRNGKey(1), 4)
    q2 = jax.random.normal(kq2, (B2, H2, Sq2, Dk2), dtype=jnp.float32)
    k2 = jax.random.normal(kk2, (B2, H2, Sk2, Dk2), dtype=jnp.float32)
    v2 = jax.random.normal(kv2, (B2, H2, Sk2, Dv2), dtype=jnp.float32)
    m2 = (jax.random.uniform(km2, (B2, 1, Sq2, Sk2)) > 0.3).astype(jnp.float32)

    _check(q2, k2, v2, Dk2, mask=None)
    _check(q2, k2, v2, Dk2, mask=m2)

    # ---- forced Sk tiling: exercises the accumulate-into-f32-output path -----
    _check(q2, k2, v2, Dk2, mask=m2, tile_q=128, tile_k=128)

    # ---- bf16 inputs with Sk tiling: exercises the f32-scratch accumulator ---
    _check(q2.astype(jnp.bfloat16), k2.astype(jnp.bfloat16),
           v2.astype(jnp.bfloat16), Dk2, mask=m2, tile_q=128, tile_k=128)

    print("KERNEL_OK")
</pallas_src>

<mosaic_0001>
module attributes {stable_mosaic.version = 11 : i64} {
  func.func @kernel(%arg0: i32, %arg1: i32, %arg2: i32, %arg3: memref<1x4x8x32xf32, #tpu.memory_space<vmem>>, %arg4: memref<1x4x8x32xf32, #tpu.memory_space<vmem>>, %arg5: memref<1x4x8x32xf32, #tpu.memory_space<vmem>>, %arg6: memref<1x4x8x32xf32, #tpu.memory_space<vmem>>) attributes {dimension_semantics = [#tpu.dimension_semantics<parallel>, #tpu.dimension_semantics<parallel>, #tpu.dimension_semantics<arbitrary>], iteration_bounds = array<i64: 2, 1, 1>, scalar_prefetch = 0 : i64, scratch_operands = 0 : i64, tpu.core_type = #tpu.core_type<tc>, window_params = [{transform_indices = @transform_0, window_bounds = array<i64: 1, 4, 8, 32>}, {transform_indices = @transform_1, window_bounds = array<i64: 1, 4, 8, 32>}, {transform_indices = @transform_2, window_bounds = array<i64: 1, 4, 8, 32>}, {transform_indices = @transform_3, window_bounds = array<i64: 1, 4, 8, 32>}]} {
    %c0 = arith.constant 0 : index
    %c0_0 = arith.constant 0 : index
    %c0_1 = arith.constant 0 : index
    %c0_2 = arith.constant 0 : index
    %0 = vector.load %arg3[%c0, %c0_0, %c0_1, %c0_2] : memref<1x4x8x32xf32, #tpu.memory_space<vmem>>, vector<1x4x8x32xf32>
    %1 = vector.shape_cast %0 : vector<1x4x8x32xf32> to vector<4x8x32xf32>
    %cst = arith.constant 0.176776692 : f32
    %2 = vector.broadcast %cst : f32 to vector<4x8x32xf32>
    %3 = arith.mulf %1, %2 : vector<4x8x32xf32>
    %4 = arith.truncf %3 : vector<4x8x32xf32> to vector<4x8x32xbf16>
    %c0_3 = arith.constant 0 : index
    %c0_4 = arith.constant 0 : index
    %c0_5 = arith.constant 0 : index
    %c0_6 = arith.constant 0 : index
    %5 = vector.load %arg4[%c0_3, %c0_4, %c0_5, %c0_6] : memref<1x4x8x32xf32, #tpu.memory_space<vmem>>, vector<1x4x8x32xf32>
    %6 = vector.shape_cast %5 : vector<1x4x8x32xf32> to vector<4x8x32xf32>
    %7 = arith.truncf %6 : vector<4x8x32xf32> to vector<4x8x32xbf16>
    "tpu.trace_start"() <{level = 10 : i32, message = "hqd,hkd->hqk"}> : () -> ()
    %cst_7 = arith.constant dense<0.000000e+00> : vector<4x8x8xf32>
    %8 = tpu.matmul %4, %7, %cst_7 {dimension_numbers = #tpu.dot_dimension_numbers<[2], [2], [1], [1], [0, 0, 0, 1, 1, 1], [0], [0]>} : vector<4x8x32xbf16>, vector<4x8x32xbf16>, vector<4x8x8xf32> -> vector<4x8x8xf32>
    "tpu.trace_stop"() : () -> ()
    %cst_8 = arith.constant dense<0xFF800000> : vector<8x8xf32>
    %9 = vector.multi_reduction <maximumf>, %8, %cst_8 [0] : vector<4x8x8xf32> to vector<8x8xf32>
    %10 = vector.shape_cast %9 : vector<8x8xf32> to vector<1x8x8xf32>
    %11 = vector.broadcast %10 : vector<1x8x8xf32> to vector<4x8x8xf32>
    %12 = arith.subf %8, %11 : vector<4x8x8xf32>
    %13 = math.exp %12 : vector<4x8x8xf32>
    %cst_9 = arith.constant dense<0.000000e+00> : vector<8x8xf32>
    %14 = vector.multi_reduction <add>, %13, %cst_9 [0] : vector<4x8x8xf32> to vector<8x8xf32>
    %15 = vector.shape_cast %14 : vector<8x8xf32> to vector<1x8x8xf32>
    %16 = tpu.reciprocal %15 {approx = true} : vector<1x8x8xf32> -> vector<1x8x8xf32>
    %17 = vector.broadcast %16 : vector<1x8x8xf32> to vector<4x8x8xf32>
    %18 = arith.mulf %13, %17 : vector<4x8x8xf32>
    %19 = arith.truncf %18 : vector<4x8x8xf32> to vector<4x8x8xbf16>
    %c0_10 = arith.constant 0 : index
    %c0_11 = arith.constant 0 : index
    %c0_12 = arith.constant 0 : index
    %c0_13 = arith.constant 0 : index
    %20 = vector.load %arg5[%c0_10, %c0_11, %c0_12, %c0_13] : memref<1x4x8x32xf32, #tpu.memory_space<vmem>>, vector<1x4x8x32xf32>
    %21 = vector.shape_cast %20 : vector<1x4x8x32xf32> to vector<4x8x32xf32>
    %22 = arith.truncf %21 : vector<4x8x32xf32> to vector<4x8x32xbf16>
    "tpu.trace_start"() <{level = 10 : i32, message = "hqk,hkd->hqd"}> : () -> ()
    %cst_14 = arith.constant dense<0.000000e+00> : vector<4x8x32xf32>
    %23 = tpu.matmul %19, %22, %cst_14 {dimension_numbers = #tpu.dot_dimension_numbers<[2], [1], [1], [2], [0, 0, 0, 1, 1, 2], [0], [0]>} : vector<4x8x8xbf16>, vector<4x8x32xbf16>, vector<4x8x32xf32> -> vector<4x8x32xf32>
    "tpu.trace_stop"() : () -> ()
    %c0_15 = arith.constant 0 : index
    %c0_16 = arith.constant 0 : index
    %c0_17 = arith.constant 0 : index
    %c0_18 = arith.constant 0 : index
    %24 = vector.load %arg6[%c0_15, %c0_16, %c0_17, %c0_18] : memref<1x4x8x32xf32, #tpu.memory_space<vmem>>, vector<1x4x8x32xf32>
    %25 = vector.shape_cast %24 : vector<1x4x8x32xf32> to vector<4x8x32xf32>
    %26 = vector.shape_cast %23 : vector<4x8x32xf32> to vector<1x4x8x32xf32>
    tpu.vector_store %arg6[%c0_15, %c0_16, %c0_17, %c0_18], %26 {strides = array<i32>} : memref<1x4x8x32xf32, #tpu.memory_space<vmem>>, vector<1x4x8x32xf32>,
    return
  }
  func.func @transform_0(%arg0: i32, %arg1: i32, %arg2: i32) -> (i32, i32, i32, i32) {
    %c0_i32 = arith.constant 0 : i32
    %c0_i32_0 = arith.constant 0 : i32
    %c0_i32_1 = arith.constant 0 : i32
    return %arg0, %c0_i32, %arg1, %c0_i32_0 : i32, i32, i32, i32
  }
  func.func @transform_1(%arg0: i32, %arg1: i32, %arg2: i32) -> (i32, i32, i32, i32) {
    %c0_i32 = arith.constant 0 : i32
    %c0_i32_0 = arith.constant 0 : i32
    %c0_i32_1 = arith.constant 0 : i32
    return %arg0, %c0_i32, %arg2, %c0_i32_0 : i32, i32, i32, i32
  }
  func.func @transform_2(%arg0: i32, %arg1: i32, %arg2: i32) -> (i32, i32, i32, i32) {
    %c0_i32 = arith.constant 0 : i32
    %c0_i32_0 = arith.constant 0 : i32
    %c0_i32_1 = arith.constant 0 : i32
    return %arg0, %c0_i32, %arg2, %c0_i32_0 : i32, i32, i32, i32
  }
  func.func @transform_3(%arg0: i32, %arg1: i32, %arg2: i32) -> (i32, i32, i32, i32) {
    %c0_i32 = arith.constant 0 : i32
    %c0_i32_0 = arith.constant 0 : i32
    %c0_i32_1 = arith.constant 0 : i32
    return %arg0, %c0_i32, %arg1, %c0_i32_0 : i32, i32, i32, i32
  }
}

</mosaic_0001>

<llo_original>
// kernel: tpu_custom_call.1
$region0: #{tpu_custom_call.1}
  #allocation0 [shape = 'u32[]', space=smem, size = 0x4, offset = 0x4, fixed_abs, tag = 'smem constant byte address 0x4 - core index']
  #allocation1 [shape = 'u32[144,128]{1,0:T(1,128)}', space=vmem, size = 0x12000, scoped, tag = 'internal scratch']
  %s0 = inlined_call_operand.hbm [shape: f32[2,4,8,32], index: 0, kind: input, shape index: {}]
  %s1 = inlined_call_operand.hbm [shape: f32[2,4,8,32], index: 1, kind: input, shape index: {}]
  %s2 = inlined_call_operand.hbm [shape: f32[2,4,8,32], index: 2, kind: input, shape index: {}]
  %s3 = inlined_call_operand.hbm [shape: f32[2,4,8,32], index: 3, kind: output, shape index: {}]
  %s4 = sld [smem:[#allocation0]]
  $region57: #{tpu_custom_call.1} parent=0
    _
  %s6 = ssub.s32 1, %s4
  %s7 = scalar_select 0, %s6, %s4
  $region1: #{tpu_custom_call.1} parent=0
    #allocation2 [shape = 'u8[32768]{0}', space=vmem, size = 0x8000, scoped, tag = 'input window, operand 0']
    #allocation3 [shape = 's32[2]{0}', space=sflag, size = 0x8, scoped, tag = 'scoped memory for tpu_custom_call.1']
    #allocation4 [shape = 's32[2]{0}', space=sflag, size = 0x8, scoped, tag = 'scoped memory for tpu_custom_call.1']
    #allocation5 [shape = 'u8[32768]{0}', space=vmem, size = 0x8000, scoped, tag = 'input window, operand 1']
    #allocation6 [shape = 's32[2]{0}', space=sflag, size = 0x8, scoped, tag = 'scoped memory for tpu_custom_call.1']
    #allocation7 [shape = 'u8[32768]{0}', space=vmem, size = 0x8000, scoped, tag = 'input window, operand 2']
    #allocation8 [shape = 'u8[32768]{0}', space=vmem, size = 0x8000, scoped, tag = 'output window, operand 0']
    %8 = vsyncpa [#allocation3], 0
    %s9 = scalar_lea.sflag [#allocation3], 1
    %10 = vsyncpa %s9, 0
    %11 = vsyncpa [#allocation6], 0
    %s12 = scalar_lea.sflag [#allocation6], 1
    %13 = vsyncpa %s12, 0
    %14 = vsyncpa [#allocation4], 0
    %s15 = scalar_lea.sflag [#allocation4], 1
    %16 = vsyncpa %s15, 0
    loop: start=0, step=1, limit=4
    $region2: #{tpu_custom_call.1} parent=1 // loop_pre_header
      _
    $region3: #{tpu_custom_call.1} parent=1 // loop_header
      %s18 = sphi 0, %s22
      %p19 = scmp.ge.s32.totalorder %s18, 4
      %s25 = sphi 0, %s44
      %s26 = sphi 0, %s40
      %s27 = sphi 0, %s36
      %s28 = sphi 0, %s25
      %s29 = sphi 0, %s26
      %s30 = sphi 0, %s27
      %s31 = sphi 0, %s28
      %s32 = sphi 0, %s29
      %s33 = sphi 0, %s30
      %s49 = sphi 0, %s51
      %s52 = sphi 0, %s49
      %s53 = sphi 0, %s52
      %s69 = sphi 0, %s53
      %s77 = sphi 0, %s79
      %s80 = sphi 0, %s77
      %s81 = sphi 0, %s80
      %s97 = sphi 0, %s81
      %s105 = sphi 0, %s107
      %s108 = sphi 0, %s105
      %s109 = sphi 0, %s108
      %s125 = sphi 0, %s109
      %s133 = sphi 0, %s135
      %s136 = sphi 0, %s133
      %s137 = sphi 0, %s136
      %s153 = sphi 0, %s137
    $region4: #{tpu_custom_call.1} parent=1 // loop_header_branch
      %21 = sbr.rel (%p19) target = $region8
    $region5: #{tpu_custom_call.1} parent=1 // loop_body
      %s23 = ssub.s32 %s18, 1
      %s24 = ssub.s32 %s18, 2
      %s34 = sadd.s32 1, %s27
      %p35 = scmp.ge.s32.totalorder %s34, 1
      %s36 = scalar_select %p35, 0, %s34
      %s37 = sadd.s32 1, %s26
      %s38 = scalar_select %p35, %s37, %s26
      %p39 = scmp.ge.s32.totalorder %s38, 1
      %s40 = scalar_select %p39, 0, %s38
      %s41 = sadd.s32 1, %s25
      %s42 = scalar_select %p39, %s41, %s25
      %p43 = scmp.ge.s32.totalorder %s42, 2
      %s44 = scalar_select %p43, 0, %s42
      %s45 = ssub.s32 %s25, %s44
      %s46 = ssub.s32 %s26, %s40
      %s47 = sor.u32 %s45, %s46
      %p48 = scmp.eq.s32.totalorder %s47, 0
      %s50 = sadd.s32 %s49, 1
      %s51 = scalar_select %p48, %s49, %s50
      %p54 = pneg %p48
      %p55 = scmp.eq.s32.totalorder %s18, 1
      %p56 = por %p54, %p55
      %p57 = scmp.ne.s32.totalorder %s49, %s52
      %p58 = scmp.eq.s32.totalorder %s18, 0
      %p59 = por %p57, %p58
      %p60 = scmp.ne.s32.totalorder %s49, %s52
      %p61 = scmp.eq.s32.totalorder %s23, 1
      %p62 = por %p60, %p61
      %p63 = scmp.ne.s32.totalorder %s52, %s53
      %p64 = scmp.eq.s32.totalorder %s23, 0
      %p65 = por %p63, %p64
      %p66 = scmp.ne.s32.totalorder %s52, %s53
      %p67 = scmp.eq.s32.totalorder %s24, 1
      %p68 = por %p66, %p67
      %p70 = scmp.ne.s32.totalorder %s53, %s69
      %p71 = scmp.eq.s32.totalorder %s24, 0
      %p72 = por %p70, %p71
      %s73 = ssub.s32 %s25, %s44
      %s74 = ssub.s32 %s27, %s36
      %s75 = sor.u32 %s73, %s74
      %p76 = scmp.eq.s32.totalorder %s75, 0
      %s78 = sadd.s32 %s77, 1
      %s79 = scalar_select %p76, %s77, %s78
      %p82 = pneg %p76
      %p83 = scmp.eq.s32.totalorder %s18, 1
      %p84 = por %p82, %p83
      %p85 = scmp.ne.s32.totalorder %s77, %s80
      %p86 = scmp.eq.s32.totalorder %s18, 0
      %p87 = por %p85, %p86
      %p88 = scmp.ne.s32.totalorder %s77, %s80
      %p89 = scmp.eq.s32.totalorder %s23, 1
      %p90 = por %p88, %p89
      %p91 = scmp.ne.s32.totalorder %s80, %s81
      %p92 = scmp.eq.s32.totalorder %s23, 0
      %p93 = por %p91, %p92
      %p94 = scmp.ne.s32.totalorder %s80, %s81
      %p95 = scmp.eq.s32.totalorder %s24, 1
      %p96 = por %p94, %p95
      %p98 = scmp.ne.s32.totalorder %s81, %s97
      %p99 = scmp.eq.s32.totalorder %s24, 0
      %p100 = por %p98, %p99
      %s101 = ssub.s32 %s25, %s44
      %s102 = ssub.s32 %s27, %s36
      %s103 = sor.u32 %s101, %s102
      %p104 = scmp.eq.s32.totalorder %s103, 0
      %s106 = sadd.s32 %s105, 1
      %s107 = scalar_select %p104, %s105, %s106
      %p110 = pneg %p104
      %p111 = scmp.eq.s32.totalorder %s18, 1
      %p112 = por %p110, %p111
      %p113 = scmp.ne.s32.totalorder %s105, %s108
      %p114 = scmp.eq.s32.totalorder %s18, 0
      %p115 = por %p113, %p114
      %p116 = scmp.ne.s32.totalorder %s105, %s108
      %p117 = scmp.eq.s32.totalorder %s23, 1
      %p118 = por %p116, %p117
      %p119 = scmp.ne.s32.totalorder %s108, %s109
      %p120 = scmp.eq.s32.totalorder %s23, 0
      %p121 = por %p119, %p120
      %p122 = scmp.ne.s32.totalorder %s108, %s109
      %p123 = scmp.eq.s32.totalorder %s24, 1
      %p124 = por %p122, %p123
      %p126 = scmp.ne.s32.totalorder %s109, %s125
      %p127 = scmp.eq.s32.totalorder %s24, 0
      %p128 = por %p126, %p127
      %s129 = ssub.s32 %s25, %s44
      %s130 = ssub.s32 %s26, %s40
      %s131 = sor.u32 %s129, %s130
      %p132 = scmp.eq.s32.totalorder %s131, 0
      %s134 = sadd.s32 %s133, 1
      %s135 = scalar_select %p132, %s133, %s134
      %p138 = pneg %p132
      %p139 = scmp.eq.s32.totalorder %s18, 1
      %p140 = por %p138, %p139
      %p141 = scmp.ne.s32.totalorder %s133, %s136
      %p142 = scmp.eq.s32.totalorder %s18, 0
      %p143 = por %p141, %p142
      %p144 = scmp.ne.s32.totalorder %s133, %s136
      %p145 = scmp.eq.s32.totalorder %s23, 1
      %p146 = por %p144, %p145
      %p147 = scmp.ne.s32.totalorder %s136, %s137
      %p148 = scmp.eq.s32.totalorder %s23, 0
      %p149 = por %p147, %p148
      %p150 = scmp.ne.s32.totalorder %s136, %s137
      %p151 = scmp.eq.s32.totalorder %s24, 1
      %p152 = por %p150, %p151
      %p154 = scmp.ne.s32.totalorder %s137, %s153
      %p155 = scmp.eq.s32.totalorder %s24, 0
      %p156 = por %p154, %p155
      %p157 = scmp.le.s32.totalorder 1, %s18
      %p158 = scmp.lt.s32.totalorder %s18, 3
      %p159 = pnand %p157, %p158
      %p160 = pneg %p159
      // Predicated region
      $region9: #{tpu_custom_call.1} parent=5 // pred_check
        _
      $region10: #{tpu_custom_call.1} parent=5 // pred_check_branch
        %162 = sbr.rel (%p159) target = $region12
      $region11: #{tpu_custom_call.1} parent=5 // pred_region
        %s163 = ssub.s32 %s18, 1
      $region12: #{tpu_custom_call.1} parent=5 // pred_fallthru
        _
      %p164 = scmp.lt.s32.totalorder %s18, 2
      // Predicated region
      $region13: #{tpu_custom_call.1} parent=5 // pred_check
        %p165 = pneg %p164
      $region14: #{tpu_custom_call.1} parent=5 // pred_check_branch
        %167 = sbr.rel (%p165) target = $region16
      $region15: #{tpu_custom_call.1} parent=5 // pred_region
        // Predicated region
        $region17: #{tpu_custom_call.1} parent=15 // pred_check
          %p168 = pneg %p59
        $region18: #{tpu_custom_call.1} parent=15 // pred_check_branch
          %170 = sbr.rel (%p168) target = $region20
        $region19: #{tpu_custom_call.1} parent=15 // pred_region
          %s171 = sand.u32 %s49, 1
          %s172 = scalar_lea.sflag [#allocation3], %s171
          %s173 = sand.u32 %s49, 1
          %s174 = smul.addr %s173, 32
          %s175 = scalar_lea.vmem [#allocation2], %s174
          %s177 = ssub.s32 512, 512
          %178 = vsyncadd %s172, %s177
          %s179 = smul.addr %s25, 4
          %s180 = sadd.s32 %s26, %s179
          %s181 = smul.addr %s180, 128
          %s182 = scalar_lea.hbm %s0, %s181
          %s183 = sshll.u32 %s175, 4
          %s184 = int_to_ptr.vmem [resolvable:$true] %s183
          %189 = dma.hbm_to_vmem [thread:$0]  %s182, 512, %s184, %s172, 128, 128, 8
        $region20: #{tpu_custom_call.1} parent=15 // pred_fallthru
          _
        // Predicated region
        $region21: #{tpu_custom_call.1} parent=15 // pred_check
          %p190 = pneg %p87
        $region22: #{tpu_custom_call.1} parent=15 // pred_check_branch
          %192 = sbr.rel (%p190) target = $region24
        $region23: #{tpu_custom_call.1} parent=15 // pred_region
          %s193 = sand.u32 %s18, 1
          %s194 = scalar_lea.sflag [#allocation6], %s193
          %s195 = sand.u32 %s77, 1
          %s196 = smul.addr %s195, 32
          %s197 = scalar_lea.vmem [#allocation5], %s196
          %s199 = ssub.s32 512, 512
          %200 = vsyncadd %s194, %s199
          %s201 = smul.addr %s25, 4
          %s202 = sadd.s32 %s27, %s201
          %s203 = smul.addr %s202, 128
          %s204 = scalar_lea.hbm %s1, %s203
          %s205 = sshll.u32 %s197, 4
          %s206 = int_to_ptr.vmem [resolvable:$true] %s205
          %211 = dma.hbm_to_vmem [thread:$0]  %s204, 512, %s206, %s194, 128, 128, 8
        $region24: #{tpu_custom_call.1} parent=15 // pred_fallthru
          _
        // Predicated region
        $region25: #{tpu_custom_call.1} parent=15 // pred_check
          %p212 = pneg %p115
        $region26: #{tpu_custom_call.1} parent=15 // pred_check_branch
          %214 = sbr.rel (%p212) target = $region28
        $region27: #{tpu_custom_call.1} parent=15 // pred_region
          %s215 = sand.u32 %s18, 1
          %s216 = scalar_lea.sflag [#allocation6], %s215
          %s217 = sand.u32 %s105, 1
          %s218 = smul.addr %s217, 32
          %s219 = scalar_lea.vmem [#allocation7], %s218
          %s221 = ssub.s32 512, 512
          %222 = vsyncadd %s216, %s221
          %s223 = smul.addr %s25, 4
          %s224 = sadd.s32 %s27, %s223
          %s225 = smul.addr %s224, 128
          %s226 = scalar_lea.hbm %s2, %s225
          %s227 = sshll.u32 %s219, 4
          %s228 = int_to_ptr.vmem [resolvable:$true] %s227
          %233 = dma.hbm_to_vmem [thread:$0]  %s226, 512, %s228, %s216, 128, 128, 8
        $region28: #{tpu_custom_call.1} parent=15 // pred_fallthru
          _
      $region16: #{tpu_custom_call.1} parent=5 // pred_fallthru
        _
      %p234 = scmp.le.s32.totalorder 1, %s18
      %p235 = scmp.lt.s32.totalorder %s18, 3
      %p236 = pnand %p234, %p235
      %p237 = pneg %p236
      // Predicated region
      $region29: #{tpu_custom_call.1} parent=5 // pred_check
        _
      $region30: #{tpu_custom_call.1} parent=5 // pred_check_branch
        %239 = sbr.rel (%p236) target = $region32
      $region31: #{tpu_custom_call.1} parent=5 // pred_region
        %s240 = ssub.s32 %s18, 1
        %s241 = sand.u32 %s52, 1
        %s242 = scalar_lea.sflag [#allocation3], %s241
        %s243 = sand.u32 %s52, 1
        %s244 = smul.addr %s243, 32
        %s245 = scalar_lea.vmem [#allocation2], %s244
        // Predicated region
        $region33: #{tpu_custom_call.1} parent=31 // pred_check
          %p246 = pneg %p65
        $region34: #{tpu_custom_call.1} parent=31 // pred_check_branch
          %248 = sbr.rel (%p246) target = $region36
        $region35: #{tpu_custom_call.1} parent=31 // pred_region
          %249 = dma.done %s242, 512
        $region36: #{tpu_custom_call.1} parent=31 // pred_fallthru
          _
        %s250 = sand.u32 %s23, 1
        %s251 = scalar_lea.sflag [#allocation6], %s250
        %s252 = sand.u32 %s80, 1
        %s253 = smul.addr %s252, 32
        %s254 = scalar_lea.vmem [#allocation5], %s253
        // Predicated region
        $region37: #{tpu_custom_call.1} parent=31 // pred_check
          %p255 = pneg %p93
        $region38: #{tpu_custom_call.1} parent=31 // pred_check_branch
          %257 = sbr.rel (%p255) target = $region40
        $region39: #{tpu_custom_call.1} parent=31 // pred_region
          %258 = dma.done %s251, 512
        $region40: #{tpu_custom_call.1} parent=31 // pred_fallthru
          _
        %s259 = sand.u32 %s23, 1
        %s260 = scalar_lea.sflag [#allocation6], %s259
        %s261 = sand.u32 %s108, 1
        %s262 = smul.addr %s261, 32
        %s263 = scalar_lea.vmem [#allocation7], %s262
        // Predicated region
        $region41: #{tpu_custom_call.1} parent=31 // pred_check
          %p264 = pneg %p121
        $region42: #{tpu_custom_call.1} parent=31 // pred_check_branch
          %266 = sbr.rel (%p264) target = $region44
        $region43: #{tpu_custom_call.1} parent=31 // pred_region
          %267 = dma.done %s260, 512
        $region44: #{tpu_custom_call.1} parent=31 // pred_fallthru
          _
        %s268 = sand.u32 %s52, 1
        %s269 = scalar_lea.sflag [#allocation3], %s268
        %s270 = sand.u32 %s52, 1
        %s271 = smul.addr %s270, 32
        %s272 = scalar_lea.vmem [#allocation2], %s271
        %p273 = pneg %p65
        %p274 = pneg %p62
        %s275 = sand.u32 %s23, 1
        %s276 = scalar_lea.sflag [#allocation6], %s275
        %s277 = sand.u32 %s80, 1
        %s278 = smul.addr %s277, 32
        %s279 = scalar_lea.vmem [#allocation5], %s278
        %p280 = pneg %p93
        %p281 = pneg %p90
        %s282 = sand.u32 %s23, 1
        %s283 = scalar_lea.sflag [#allocation6], %s282
        %s284 = sand.u32 %s108, 1
        %s285 = smul.addr %s284, 32
        %s286 = scalar_lea.vmem [#allocation7], %s285
        %p287 = pneg %p121
        %p288 = pneg %p118
        %p289 = pneg %p149
        %p290 = pneg %p146
        %s291 = sand.u32 %s136, 1
        %s292 = scalar_lea.sflag [#allocation4], %s291
        %s293 = sand.u32 %s136, 1
        %s294 = smul.addr %s293, 32
        %s295 = scalar_lea.vmem [#allocation8], %s294
        %v297 = vld [vmem:[%s245] sm:$0xff]
        %v298 = vld [vmem:[%s245 + $0x8] sm:$0xff]
        %v299 = vld [vmem:[%s245 + $0x10] sm:$0xff]
        %v300 = vld [vmem:[%s245 + $0x18] sm:$0xff]
        %v301 = vmul.f32 %v297, 0.17677669
        %v302 = vmul.f32 %v298, 0.17677669
        %v303 = vmul.f32 %v299, 0.17677669
        %v304 = vmul.f32 %v300, 0.17677669
        %v305 = vpack.c.bf16 %v301, %v301
        %v306 = vpack.c.bf16 %v302, %v302
        %v307 = vpack.c.bf16 %v303, %v303
        %v308 = vpack.c.bf16 %v304, %v304
        %v309 = vld [vmem:[%s254] sm:$0xff]
        %v310 = vld [vmem:[%s254 + $0x8] sm:$0xff]
        %v311 = vld [vmem:[%s254 + $0x10] sm:$0xff]
        %v312 = vld [vmem:[%s254 + $0x18] sm:$0xff]
        %v313 = vpack.c.bf16 %v309, %v309
        %v314 = vpack.c.bf16 %v310, %v310
        %v315 = vpack.c.bf16 %v311, %v311
        %v316 = vpack.c.bf16 %v312, %v312
        %vm317 = vcmask 261120
        %v319 = vsel %vm317, %v305, 0
        %v322 = vsel %vm317, %v313, 0
        %324 = vmatprep.subr.bf16.mxu0 0
        %325 = vmatpush1.bf16.xpose.msra.mxu0 %v322
        %326 = vmatprep.subr.bf16.mxu0 0
        %327 = vmatpush1.bf16.xpose.msra.mxu0 0
        %328 = vmatprep.subr.bf16.mxu0 0
        %329 = vmatpush1.bf16.xpose.msra.mxu0 0
        %330 = vmatprep.subr.bf16.mxu0 0
        %331 = vmatpush1.bf16.xpose.msra.mxu0 0
        %332 = vmatprep.subr.bf16.mxu0 0
        %333 = vmatpush1.bf16.xpose.msra.mxu0 0
        %334 = vmatprep.subr.bf16.mxu0 0
        %335 = vmatpush1.bf16.xpose.msra.mxu0 0
        %336 = vmatprep.subr.bf16.mxu0 0
        %337 = vmatpush1.bf16.xpose.msra.mxu0 0
        %338 = vmatprep.subr.bf16.mxu0 0
        %339 = vmatpush1.bf16.xpose.msra.mxu0 0
        %340 = vmatprep.subr.bf16.mxu0 0
        %341 = vmatpush1.bf16.xpose.msra.mxu0 0
        %342 = vmatprep.subr.bf16.mxu0 0
        %343 = vmatpush1.bf16.xpose.msra.mxu0 0
        %344 = vmatprep.subr.bf16.mxu0 0
        %345 = vmatpush1.bf16.xpose.msra.mxu0 0
        %346 = vmatprep.subr.bf16.mxu0 0
        %347 = vmatpush1.bf16.xpose.msra.mxu0 0
        %348 = vmatprep.subr.bf16.mxu0 0
        %349 = vmatpush1.bf16.xpose.msra.mxu0 0
        %350 = vmatprep.subr.bf16.mxu0 0
        %351 = vmatpush1.bf16.xpose.msra.mxu0 0
        %352 = vmatprep.subr.bf16.mxu0 0
        %353 = vmatpush1.bf16.xpose.msra.mxu0 0
        %354 = vmatprep.subr.bf16.mxu0 0
        %355 = vmatpush1.bf16.xpose.msra.mxu0 0
        %356 = vmatprep.mubr.bf16.mxu0 0
        %357 = vmatmul.mubr.bf16.gmra.mrb[0].mxu0 %v319
        %v358 = vpop.f32.mrb[0].mxu0
        %v359 = vadd.f32 0.0, %v358
        %v360 = vpop.f32.mrb[0].mxu0
        %v361 = vpop.f32.mrb[0].mxu0
        %v362 = vpop.f32.mrb[0].mxu0
        %363 = vdwg.mxu0
        %v365 = vsel %vm317, %v306, 0
        %v368 = vsel %vm317, %v314, 0
        %370 = vmatprep.subr.bf16.mxu0 0
        %371 = vmatpush1.bf16.xpose.msra.mxu0 %v368
        %372 = vmatprep.subr.bf16.mxu0 0
        %373 = vmatpush1.bf16.xpose.msra.mxu0 0
        %374 = vmatprep.subr.bf16.mxu0 0
        %375 = vmatpush1.bf16.xpose.msra.mxu0 0
        %376 = vmatprep.subr.bf16.mxu0 0
        %377 = vmatpush1.bf16.xpose.msra.mxu0 0
        %378 = vmatprep.subr.bf16.mxu0 0
        %379 = vmatpush1.bf16.xpose.msra.mxu0 0
        %380 = vmatprep.subr.bf16.mxu0 0
        %381 = vmatpush1.bf16.xpose.msra.mxu0 0
        %382 = vmatprep.subr.bf16.mxu0 0
        %383 = vmatpush1.bf16.xpose.msra.mxu0 0
        %384 = vmatprep.subr.bf16.mxu0 0
        %385 = vmatpush1.bf16.xpose.msra.mxu0 0
        %386 = vmatprep.subr.bf16.mxu0 0
        %387 = vmatpush1.bf16.xpose.msra.mxu0 0
        %388 = vmatprep.subr.bf16.mxu0 0
        %389 = vmatpush1.bf16.xpose.msra.mxu0 0
        %390 = vmatprep.subr.bf16.mxu0 0
        %391 = vmatpush1.bf16.xpose.msra.mxu0 0
        %392 = vmatprep.subr.bf16.mxu0 0
        %393 = vmatpush1.bf16.xpose.msra.mxu0 0
        %394 = vmatprep.subr.bf16.mxu0 0
        %395 = vmatpush1.bf16.xpose.msra.mxu0 0
        %396 = vmatprep.subr.bf16.mxu0 0
        %397 = vmatpush1.bf16.xpose.msra.mxu0 0
        %398 = vmatprep.subr.bf16.mxu0 0
        %399 = vmatpush1.bf16.xpose.msra.mxu0 0
        %400 = vmatprep.subr.bf16.mxu0 0
        %401 = vmatpush1.bf16.xpose.msra.mxu0 0
        %402 = vmatprep.mubr.bf16.mxu0 0
        %403 = vmatmul.mubr.bf16.gmra.mrb[0].mxu0 %v365
        %v404 = vpop.f32.mrb[0].mxu0
        %v405 = vadd.f32 0.0, %v404
        %v406 = vpop.f32.mrb[0].mxu0
        %v407 = vpop.f32.mrb[0].mxu0
        %v408 = vpop.f32.mrb[0].mxu0
        %409 = vdwg.mxu0
        %v411 = vsel %vm317, %v307, 0
        %v414 = vsel %vm317, %v315, 0
        %416 = vmatprep.subr.bf16.mxu0 0
        %417 = vmatpush1.bf16.xpose.msra.mxu0 %v414
        %418 = vmatprep.subr.bf16.mxu0 0
        %419 = vmatpush1.bf16.xpose.msra.mxu0 0
        %420 = vmatprep.subr.bf16.mxu0 0
        %421 = vmatpush1.bf16.xpose.msra.mxu0 0
        %422 = vmatprep.subr.bf16.mxu0 0
        %423 = vmatpush1.bf16.xpose.msra.mxu0 0
        %424 = vmatprep.subr.bf16.mxu0 0
        %425 = vmatpush1.bf16.xpose.msra.mxu0 0
        %426 = vmatprep.subr.bf16.mxu0 0
        %427 = vmatpush1.bf16.xpose.msra.mxu0 0
        %428 = vmatprep.subr.bf16.mxu0 0
        %429 = vmatpush1.bf16.xpose.msra.mxu0 0
        %430 = vmatprep.subr.bf16.mxu0 0
        %431 = vmatpush1.bf16.xpose.msra.mxu0 0
        %432 = vmatprep.subr.bf16.mxu0 0
        %433 = vmatpush1.bf16.xpose.msra.mxu0 0
        %434 = vmatprep.subr.bf16.mxu0 0
        %435 = vmatpush1.bf16.xpose.msra.mxu0 0
        %436 = vmatprep.subr.bf16.mxu0 0
        %437 = vmatpush1.bf16.xpose.msra.mxu0 0
        %438 = vmatprep.subr.bf16.mxu0 0
        %439 = vmatpush1.bf16.xpose.msra.mxu0 0
        %440 = vmatprep.subr.bf16.mxu0 0
        %441 = vmatpush1.bf16.xpose.msra.mxu0 0
        %442 = vmatprep.subr.bf16.mxu0 0
        %443 = vmatpush1.bf16.xpose.msra.mxu0 0
        %444 = vmatprep.subr.bf16.mxu0 0
        %445 = vmatpush1.bf16.xpose.msra.mxu0 0
        %446 = vmatprep.subr.bf16.mxu0 0
        %447 = vmatpush1.bf16.xpose.msra.mxu0 0
        %448 = vmatprep.mubr.bf16.mxu0 0
        %449 = vmatmul.mubr.bf16.gmra.mrb[0].mxu0 %v411
        %v450 = vpop.f32.mrb[0].mxu0
        %v451 = vadd.f32 0.0, %v450
        %v452 = vpop.f32.mrb[0].mxu0
        %v453 = vpop.f32.mrb[0].mxu0
        %v454 = vpop.f32.mrb[0].mxu0
        %455 = vdwg.mxu0
        %v457 = vsel %vm317, %v308, 0
        %v460 = vsel %vm317, %v316, 0
        %462 = vmatprep.subr.bf16.mxu0 0
        %463 = vmatpush1.bf16.xpose.msra.mxu0 %v460
        %464 = vmatprep.subr.bf16.mxu0 0
        %465 = vmatpush1.bf16.xpose.msra.mxu0 0
        %466 = vmatprep.subr.bf16.mxu0 0
        %467 = vmatpush1.bf16.xpose.msra.mxu0 0
        %468 = vmatprep.subr.bf16.mxu0 0
        %469 = vmatpush1.bf16.xpose.msra.mxu0 0
        %470 = vmatprep.subr.bf16.mxu0 0
        %471 = vmatpush1.bf16.xpose.msra.mxu0 0
        %472 = vmatprep.subr.bf16.mxu0 0
        %473 = vmatpush1.bf16.xpose.msra.mxu0 0
        %474 = vmatprep.subr.bf16.mxu0 0
        %475 = vmatpush1.bf16.xpose.msra.mxu0 0
        %476 = vmatprep.subr.bf16.mxu0 0
        %477 = vmatpush1.bf16.xpose.msra.mxu0 0
        %478 = vmatprep.subr.bf16.mxu0 0
        %479 = vmatpush1.bf16.xpose.msra.mxu0 0
        %480 = vmatprep.subr.bf16.mxu0 0
        %481 = vmatpush1.bf16.xpose.msra.mxu0 0
        %482 = vmatprep.subr.bf16.mxu0 0
        %483 = vmatpush1.bf16.xpose.msra.mxu0 0
        %484 = vmatprep.subr.bf16.mxu0 0
        %485 = vmatpush1.bf16.xpose.msra.mxu0 0
        %486 = vmatprep.subr.bf16.mxu0 0
        %487 = vmatpush1.bf16.xpose.msra.mxu0 0
        %488 = vmatprep.subr.bf16.mxu0 0
        %489 = vmatpush1.bf16.xpose.msra.mxu0 0
        %490 = vmatprep.subr.bf16.mxu0 0
        %491 = vmatpush1.bf16.xpose.msra.mxu0 0
        %492 = vmatprep.subr.bf16.mxu0 0
        %493 = vmatpush1.bf16.xpose.msra.mxu0 0
        %494 = vmatprep.mubr.bf16.mxu0 0
        %495 = vmatmul.mubr.bf16.gmra.mrb[0].mxu0 %v457
        %v496 = vpop.f32.mrb[0].mxu0
        %v497 = vadd.f32 0.0, %v496
        %v498 = vpop.f32.mrb[0].mxu0
        %v499 = vpop.f32.mrb[0].mxu0
        %v500 = vpop.f32.mrb[0].mxu0
        %501 = vdwg.mxu0
        %vm502 = vcmask 64512
        %v503 = vsel %vm502, %v359, -inf
        %v504 = vsel %vm502, %v405, -inf
        %v505 = vsel %vm502, %v451, -inf
        %v506 = vsel %vm502, %v497, -inf
        %v507 = vmax.f32 %v503, %v504
        %v508 = vmax.f32 %v505, %v506
        %v509 = vmax.f32 %v507, %v508
        %v510 = vsub.f32 %v359, %v509
        %v511 = vsub.f32 %v405, %v509
        %v512 = vsub.f32 %v451, %v509
        %v513 = vsub.f32 %v497, %v509
        %v514 = vmul.f32 %v510, 1.442695
        %v515 = vpow.pop %v514
        %v516 = vmul.f32 %v511, 1.442695
        %v517 = vpow.pop %v516
        %v518 = vmul.f32 %v512, 1.442695
        %v519 = vpow.pop %v518
        %v520 = vmul.f32 %v513, 1.442695
        %v521 = vpow.pop %v520
        %v522 = vsel %vm502, %v515, 0.0
        %v523 = vsel %vm502, %v517, 0.0
        %v524 = vadd.f32 %v522, %v523
        %v525 = vsel %vm502, %v519, 0.0
        %v526 = vadd.f32 %v524, %v525
        %v527 = vsel %vm502, %v521, 0.0
        %v528 = vadd.f32 %v526, %v527
        %v529 = vrcp.pop %v528
        %v530 = vmul.f32 %v515, %v529
        %v531 = vmul.f32 %v517, %v529
        %v532 = vmul.f32 %v519, %v529
        %v533 = vmul.f32 %v521, %v529
        %v534 = vpack.c.bf16 %v530, %v530
        %v535 = vpack.c.bf16 %v531, %v531
        %v536 = vpack.c.bf16 %v532, %v532
        %v537 = vpack.c.bf16 %v533, %v533
        %v538 = vld [vmem:[%s263] sm:$0xff]
        %v539 = vld [vmem:[%s263 + $0x8] sm:$0xff]
        %v540 = vld [vmem:[%s263 + $0x10] sm:$0xff]
        %v541 = vld [vmem:[%s263 + $0x18] sm:$0xff]
        %v542 = vpack.c.bf16 %v538, %v538
        %v543 = vpack.c.bf16 %v539, %v539
        %v544 = vpack.c.bf16 %v540, %v540
        %v545 = vpack.c.bf16 %v541, %v541
        %v547 = vsel %vm502, %v534, 0
        %vm549 = vcmask 1043456
        %v551 = vsel %vm549, %v542, 0
        %553 = vmatprep.subr.bf16.mxu0 0
        %554 = vmatpush1.bf16.msra.mxu0 %v551
        %555 = vmatprep.subr.bf16.mxu0 0
        %556 = vmatpush1.bf16.msra.mxu0 0
        %557 = vmatprep.subr.bf16.mxu0 0
        %558 = vmatpush1.bf16.msra.mxu0 0
        %559 = vmatprep.subr.bf16.mxu0 0
        %560 = vmatpush1.bf16.msra.mxu0 0
        %561 = vmatprep.subr.bf16.mxu0 0
        %562 = vmatpush1.bf16.msra.mxu0 0
        %563 = vmatprep.subr.bf16.mxu0 0
        %564 = vmatpush1.bf16.msra.mxu0 0
        %565 = vmatprep.subr.bf16.mxu0 0
        %566 = vmatpush1.bf16.msra.mxu0 0
        %567 = vmatprep.subr.bf16.mxu0 0
        %568 = vmatpush1.bf16.msra.mxu0 0
        %569 = vmatprep.subr.bf16.mxu0 0
        %570 = vmatpush1.bf16.msra.mxu0 0
        %571 = vmatprep.subr.bf16.mxu0 0
        %572 = vmatpush1.bf16.msra.mxu0 0
        %573 = vmatprep.subr.bf16.mxu0 0
        %574 = vmatpush1.bf16.msra.mxu0 0
        %575 = vmatprep.subr.bf16.mxu0 0
        %576 = vmatpush1.bf16.msra.mxu0 0
        %577 = vmatprep.subr.bf16.mxu0 0
        %578 = vmatpush1.bf16.msra.mxu0 0
        %579 = vmatprep.subr.bf16.mxu0 0
        %580 = vmatpush1.bf16.msra.mxu0 0
        %581 = vmatprep.subr.bf16.mxu0 0
        %582 = vmatpush1.bf16.msra.mxu0 0
        %583 = vmatprep.subr.bf16.mxu0 0
        %584 = vmatpush1.bf16.msra.mxu0 0
        %585 = vmatprep.mubr.bf16.mxu0 0
        %586 = vmatmul.mubr.bf16.gmra.mrb[0].mxu0 %v547
        %v587 = vpop.f32.mrb[0].mxu0
        %v588 = vadd.f32 0.0, %v587
        %v589 = vpop.f32.mrb[0].mxu0
        %v590 = vpop.f32.mrb[0].mxu0
        %v591 = vpop.f32.mrb[0].mxu0
        %592 = vdwg.mxu0
        %v594 = vsel %vm502, %v535, 0
        %v597 = vsel %vm549, %v543, 0
        %599 = vmatprep.subr.bf16.mxu0 0
        %600 = vmatpush1.bf16.msra.mxu0 %v597
        %601 = vmatprep.subr.bf16.mxu0 0
        %602 = vmatpush1.bf16.msra.mxu0 0
        %603 = vmatprep.subr.bf16.mxu0 0
        %604 = vmatpush1.bf16.msra.mxu0 0
        %605 = vmatprep.subr.bf16.mxu0 0
        %606 = vmatpush1.bf16.msra.mxu0 0
        %607 = vmatprep.subr.bf16.mxu0 0
        %608 = vmatpush1.bf16.msra.mxu0 0
        %609 = vmatprep.subr.bf16.mxu0 0
        %610 = vmatpush1.bf16.msra.mxu0 0
        %611 = vmatprep.subr.bf16.mxu0 0
        %612 = vmatpush1.bf16.msra.mxu0 0
        %613 = vmatprep.subr.bf16.mxu0 0
        %614 = vmatpush1.bf16.msra.mxu0 0
        %615 = vmatprep.subr.bf16.mxu0 0
        %616 = vmatpush1.bf16.msra.mxu0 0
        %617 = vmatprep.subr.bf16.mxu0 0
        %618 = vmatpush1.bf16.msra.mxu0 0
        %619 = vmatprep.subr.bf16.mxu0 0
        %620 = vmatpush1.bf16.msra.mxu0 0
        %621 = vmatprep.subr.bf16.mxu0 0
        %622 = vmatpush1.bf16.msra.mxu0 0
        %623 = vmatprep.subr.bf16.mxu0 0
        %624 = vmatpush1.bf16.msra.mxu0 0
        %625 = vmatprep.subr.bf16.mxu0 0
        %626 = vmatpush1.bf16.msra.mxu0 0
        %627 = vmatprep.subr.bf16.mxu0 0
        %628 = vmatpush1.bf16.msra.mxu0 0
        %629 = vmatprep.subr.bf16.mxu0 0
        %630 = vmatpush1.bf16.msra.mxu0 0
        %631 = vmatprep.mubr.bf16.mxu0 0
        %632 = vmatmul.mubr.bf16.gmra.mrb[0].mxu0 %v594
        %v633 = vpop.f32.mrb[0].mxu0
        %v634 = vadd.f32 0.0, %v633
        %v635 = vpop.f32.mrb[0].mxu0
        %v636 = vpop.f32.mrb[0].mxu0
        %v637 = vpop.f32.mrb[0].mxu0
        %638 = vdwg.mxu0
        %v640 = vsel %vm502, %v536, 0
        %v643 = vsel %vm549, %v544, 0
        %645 = vmatprep.subr.bf16.mxu0 0
        %646 = vmatpush1.bf16.msra.mxu0 %v643
        %647 = vmatprep.subr.bf16.mxu0 0
        %648 = vmatpush1.bf16.msra.mxu0 0
        %649 = vmatprep.subr.bf16.mxu0 0
        %650 = vmatpush1.bf16.msra.mxu0 0
        %651 = vmatprep.subr.bf16.mxu0 0
        %652 = vmatpush1.bf16.msra.mxu0 0
        %653 = vmatprep.subr.bf16.mxu0 0
        %654 = vmatpush1.bf16.msra.mxu0 0
        %655 = vmatprep.subr.bf16.mxu0 0
        %656 = vmatpush1.bf16.msra.mxu0 0
        %657 = vmatprep.subr.bf16.mxu0 0
        %658 = vmatpush1.bf16.msra.mxu0 0
        %659 = vmatprep.subr.bf16.mxu0 0
        %660 = vmatpush1.bf16.msra.mxu0 0
        %661 = vmatprep.subr.bf16.mxu0 0
        %662 = vmatpush1.bf16.msra.mxu0 0
        %663 = vmatprep.subr.bf16.mxu0 0
        %664 = vmatpush1.bf16.msra.mxu0 0
        %665 = vmatprep.subr.bf16.mxu0 0
        %666 = vmatpush1.bf16.msra.mxu0 0
        %667 = vmatprep.subr.bf16.mxu0 0
        %668 = vmatpush1.bf16.msra.mxu0 0
        %669 = vmatprep.subr.bf16.mxu0 0
        %670 = vmatpush1.bf16.msra.mxu0 0
        %671 = vmatprep.subr.bf16.mxu0 0
        %672 = vmatpush1.bf16.msra.mxu0 0
        %673 = vmatprep.subr.bf16.mxu0 0
        %674 = vmatpush1.bf16.msra.mxu0 0
        %675 = vmatprep.subr.bf16.mxu0 0
        %676 = vmatpush1.bf16.msra.mxu0 0
        %677 = vmatprep.mubr.bf16.mxu0 0
        %678 = vmatmul.mubr.bf16.gmra.mrb[0].mxu0 %v640
        %v679 = vpop.f32.mrb[0].mxu0
        %v680 = vadd.f32 0.0, %v679
        %v681 = vpop.f32.mrb[0].mxu0
        %v682 = vpop.f32.mrb[0].mxu0
        %v683 = vpop.f32.mrb[0].mxu0
        %684 = vdwg.mxu0
        %v686 = vsel %vm502, %v537, 0
        %v689 = vsel %vm549, %v545, 0
        %691 = vmatprep.subr.bf16.mxu0 0
        %692 = vmatpush1.bf16.msra.mxu0 %v689
        %693 = vmatprep.subr.bf16.mxu0 0
        %694 = vmatpush1.bf16.msra.mxu0 0
        %695 = vmatprep.subr.bf16.mxu0 0
        %696 = vmatpush1.bf16.msra.mxu0 0
        %697 = vmatprep.subr.bf16.mxu0 0
        %698 = vmatpush1.bf16.msra.mxu0 0
        %699 = vmatprep.subr.bf16.mxu0 0
        %700 = vmatpush1.bf16.msra.mxu0 0
        %701 = vmatprep.subr.bf16.mxu0 0
        %702 = vmatpush1.bf16.msra.mxu0 0
        %703 = vmatprep.subr.bf16.mxu0 0
        %704 = vmatpush1.bf16.msra.mxu0 0
        %705 = vmatprep.subr.bf16.mxu0 0
        %706 = vmatpush1.bf16.msra.mxu0 0
        %707 = vmatprep.subr.bf16.mxu0 0
        %708 = vmatpush1.bf16.msra.mxu0 0
        %709 = vmatprep.subr.bf16.mxu0 0
        %710 = vmatpush1.bf16.msra.mxu0 0
        %711 = vmatprep.subr.bf16.mxu0 0
        %712 = vmatpush1.bf16.msra.mxu0 0
        %713 = vmatprep.subr.bf16.mxu0 0
        %714 = vmatpush1.bf16.msra.mxu0 0
        %715 = vmatprep.subr.bf16.mxu0 0
        %716 = vmatpush1.bf16.msra.mxu0 0
        %717 = vmatprep.subr.bf16.mxu0 0
        %718 = vmatpush1.bf16.msra.mxu0 0
        %719 = vmatprep.subr.bf16.mxu0 0
        %720 = vmatpush1.bf16.msra.mxu0 0
        %721 = vmatprep.subr.bf16.mxu0 0
        %722 = vmatpush1.bf16.msra.mxu0 0
        %723 = vmatprep.mubr.bf16.mxu0 0
        %724 = vmatmul.mubr.bf16.gmra.mrb[0].mxu0 %v686
        %v725 = vpop.f32.mrb[0].mxu0
        %v726 = vadd.f32 0.0, %v725
        %v727 = vpop.f32.mrb[0].mxu0
        %v728 = vpop.f32.mrb[0].mxu0
        %v729 = vpop.f32.mrb[0].mxu0
        %730 = vdwg.mxu0
        %731 = vst.msk [vmem:[%s295] sm:$0xff] %vm317, %v588
        %732 = vst.msk [vmem:[%s295 + $0x8] sm:$0xff] %vm317, %v634
        %733 = vst.msk [vmem:[%s295 + $0x10] sm:$0xff] %vm317, %v680
        %734 = vst.msk [vmem:[%s295 + $0x18] sm:$0xff] %vm317, %v726
        %s735 = sand.u32 %s136, 1
        %s736 = scalar_lea.sflag [#allocation4], %s735
        %s737 = sand.u32 %s136, 1
        %s738 = smul.addr %s737, 32
        %s739 = scalar_lea.vmem [#allocation8], %s738
        // Predicated region
        $region45: #{tpu_custom_call.1} parent=31 // pred_check
          %p740 = pneg %p146
        $region46: #{tpu_custom_call.1} parent=31 // pred_check_branch
          %742 = sbr.rel (%p740) target = $region48
        $region47: #{tpu_custom_call.1} parent=31 // pred_region
          %s744 = ssub.s32 512, 512
          %745 = vsyncadd %s736, %s744
          %s746 = smul.addr %s28, 4
          %s747 = sadd.s32 %s29, %s746
          %s748 = smul.addr %s747, 128
          %s749 = scalar_lea.hbm %s3, %s748
          %s750 = sshll.u32 %s739, 4
          %s751 = int_to_ptr.vmem [resolvable:$true] %s750
          %756 = dma.vmem_to_hbm [thread:$0]  %s751, 512, %s749, %s736, 128, 128, 8
        $region48: #{tpu_custom_call.1} parent=31 // pred_fallthru
          _
      $region32: #{tpu_custom_call.1} parent=5 // pred_fallthru
        _
      %p757 = scmp.le.s32.totalorder 2, %s18
      // Predicated region
      $region49: #{tpu_custom_call.1} parent=5 // pred_check
        %p758 = pneg %p757
      $region50: #{tpu_custom_call.1} parent=5 // pred_check_branch
        %760 = sbr.rel (%p758) target = $region52
      $region51: #{tpu_custom_call.1} parent=5 // pred_region
        %s761 = ssub.s32 %s18, 2
        // Predicated region
        $region53: #{tpu_custom_call.1} parent=51 // pred_check
          %p762 = pneg %p152
        $region54: #{tpu_custom_call.1} parent=51 // pred_check_branch
          %764 = sbr.rel (%p762) target = $region56
        $region55: #{tpu_custom_call.1} parent=51 // pred_region
          %s765 = sand.u32 %s137, 1
          %s766 = scalar_lea.sflag [#allocation4], %s765
          %s767 = sand.u32 %s137, 1
          %s768 = smul.addr %s767, 32
          %s769 = scalar_lea.vmem [#allocation8], %s768
          %770 = dma.done %s766, 512
        $region56: #{tpu_custom_call.1} parent=51 // pred_fallthru
          _
      $region52: #{tpu_custom_call.1} parent=5 // pred_fallthru
        _
    $region6: #{tpu_custom_call.1} parent=1 // loop_footer
      %s22 = sadd.s32 1, %s18
    $region7: #{tpu_custom_call.1} parent=1 // loop_footer_branch
      %17 = sbr.rel target = $region3
    $region8: #{tpu_custom_call.1} parent=1 // loop_exit
      _
    %771 = vsyncpa [#allocation3], 1
    %s772 = scalar_lea.sflag [#allocation3], 1
    %773 = vsyncpa %s772, 1
    %774 = vsyncpa [#allocation6], 1
    %s775 = scalar_lea.sflag [#allocation6], 1
    %776 = vsyncpa %s775, 1
    %777 = vsyncpa [#allocation4], 1
    %s778 = scalar_lea.sflag [#allocation4], 1
    %779 = vsyncpa %s778, 1

</llo_original>
